<compile_context>
chip_gen: v6e
topology: v6e:2x2x1
jax: 0.10.0
libtpu: 0.0.40
codegen_flags: <defaults>
</compile_context>

<pallas_src>
import jax
import jax.numpy as jnp
from jax.experimental import pallas as pl
from jax.experimental.pallas import tpu as pltpu


def _round_up(x, m):
    return (x + m - 1) // m * m


def _feature_dropout_kernel(keep_ref, x_ref, o_ref):
    """keep_ref: VMEM (TILE_R, 1) 0/1 values (one per channel-row).
    x_ref / o_ref: VMEM (TILE_R, L_pad)."""
    keep = keep_ref[...] != 0                      # (TILE_R, 1) bool
    # select (not multiply) so bf16 on v5e avoids a widened f32 multiply
    o_ref[...] = jnp.where(keep, x_ref[...], 0)    # broadcast over lanes


def random_dropout(x, key, p=0.5, training=True):
    """JAX/Pallas equivalent of RandomDropout.forward.

    x: (B, C, H, W) array. key: jax PRNG key (per-call randomness).
    """
    if not training or p <= 0.0:
        return x

    B, C, H, W = x.shape
    k_theta, k_mask = jax.random.split(key)

    # theta ~ Uniform(0, p): the drop probability for this forward call.
    theta = jax.random.uniform(k_theta, (), jnp.float32, 0.0, p)
    # One Bernoulli draw per (batch, channel): keep with prob 1 - theta,
    # kept channels are NOT rescaled.
    u = jax.random.uniform(k_mask, (B * C, 1), jnp.float32)
    keep = (u >= theta).astype(x.dtype)            # (B*C, 1) of 0/1

    # ---- layout: 2-D slab, rows = channels, lanes = spatial ----------------
    R, L = B * C, H * W
    itemsize = jnp.dtype(x.dtype).itemsize
    sub = {4: 8, 2: 16, 1: 32}.get(itemsize, 8)    # sublane packing per dtype

    # Lane-dense output: pad spatial extent to a multiple of 128.
    L_pad = _round_up(L, 128)

    # Biggest row tile giving ~2 MiB blocks (multiple of the sublane packing),
    # but never bigger than the (padded) row count.
    target_block_bytes = 2 * 1024 * 1024
    tile_r = max(sub, (target_block_bytes // (L_pad * itemsize)) // sub * sub)
    tile_r = min(tile_r, _round_up(R, sub))
    R_pad = _round_up(R, tile_r)

    x2 = x.reshape(R, L)
    if (R_pad, L_pad) != (R, L):
        x2 = jnp.pad(x2, ((0, R_pad - R), (0, L_pad - L)))
    if R_pad != R:
        keep = jnp.pad(keep, ((0, R_pad - R), (0, 0)))

    grid = (R_pad // tile_r,)

    # Double-buffered in + out blocks + mask blocks, with headroom; keep the
    # scoped limit within v7x's 64 MiB VMEM per TensorCore.
    block_bytes = tile_r * L_pad * itemsize
    vmem_needed = 4 * block_bytes + 4 * tile_r * itemsize
    vmem_limit = int(min(max(2 * vmem_needed, 32 << 20), 48 << 20))

    out2 = pl.pallas_call(
        _feature_dropout_kernel,
        out_shape=jax.ShapeDtypeStruct((R_pad, L_pad), x.dtype),
        grid=grid,
        in_specs=[
            pl.BlockSpec((tile_r, 1), lambda i: (i, 0)),       # keep mask
            pl.BlockSpec((tile_r, L_pad), lambda i: (i, 0)),   # x slab
        ],
        out_specs=pl.BlockSpec((tile_r, L_pad), lambda i: (i, 0)),
        input_output_aliases={1: 0},   # donate the (padded) input slab
        compiler_params=pltpu.CompilerParams(
            dimension_semantics=("parallel",),   # shard rows across v7x cores
            vmem_limit_bytes=vmem_limit,
        ),
    )(keep, x2)

    if (R_pad, L_pad) != (R, L):
        out2 = out2[:R, :L]
    return out2.reshape(B, C, H, W)


if __name__ == "__main__":
    import numpy as np

    key = jax.random.PRNGKey(0)
    k_x, k_drop = jax.random.split(key)

    B, C, H, W = 2, 4, 16, 16
    x = jax.random.normal(k_x, (B, C, H, W), dtype=jnp.float32)

    y = jax.block_until_ready(random_dropout(x, k_drop, p=0.5, training=True))

    # Sanity: each (b, c) channel is either identical to the input or all
    # zeros, and kept channels are NOT rescaled.
    xn = np.asarray(x)
    yn = np.asarray(y)
    assert yn.shape == xn.shape and yn.dtype == xn.dtype
    for b in range(B):
        for c in range(C):
            kept = np.array_equal(yn[b, c], xn[b, c])
            dropped = np.all(yn[b, c] == 0.0)
            assert kept or dropped, f"channel ({b},{c}) partially dropped"

    # Eval mode is identity.
    y_eval = jax.block_until_ready(random_dropout(x, k_drop, p=0.5, training=False))
    assert np.array_equal(np.asarray(y_eval), xn)

    print("KERNEL_OK")
</pallas_src>

<mosaic_0001>
module attributes {stable_mosaic.version = 11 : i64} {
  func.func @_feature_dropout_kernel(%arg0: i32, %arg1: memref<8x1xf32, #tpu.memory_space<vmem>>, %arg2: memref<8x256xf32, #tpu.memory_space<vmem>>, %arg3: memref<8x256xf32, #tpu.memory_space<vmem>>) attributes {dimension_semantics = [#tpu.dimension_semantics<parallel>], iteration_bounds = array<i64: 1>, scalar_prefetch = 0 : i64, scratch_operands = 0 : i64, tpu.core_type = #tpu.core_type<tc>, window_params = [{transform_indices = @transform_0, window_bounds = array<i64: 8, 1>}, {transform_indices = @transform_1, window_bounds = array<i64: 8, 256>}, {transform_indices = @transform_2, window_bounds = array<i64: 8, 256>}]} {
    %c0 = arith.constant 0 : index
    %c0_0 = arith.constant 0 : index
    %0 = vector.load %arg1[%c0, %c0_0] : memref<8x1xf32, #tpu.memory_space<vmem>>, vector<8x1xf32>
    %cst = arith.constant 0.000000e+00 : f32
    %1 = vector.broadcast %cst : f32 to vector<8x1xf32>
    %2 = arith.cmpf one, %0, %1 : vector<8x1xf32>
    %c0_1 = arith.constant 0 : index
    %c0_2 = arith.constant 0 : index
    %3 = vector.load %arg2[%c0_1, %c0_2] : memref<8x256xf32, #tpu.memory_space<vmem>>, vector<8x256xf32>
    %c0_i32 = arith.constant 0 : i32
    %4 = arith.sitofp %c0_i32 : i32 to f32
    %5 = vector.shape_cast %2 : vector<8x1xi1> to vector<8x1xi1>
    %6 = vector.broadcast %5 : vector<8x1xi1> to vector<8x256xi1>
    %7 = vector.broadcast %4 : f32 to vector<8x256xf32>
    %8 = arith.select %6, %3, %7 : vector<8x256xi1>, vector<8x256xf32>
    %c0_3 = arith.constant 0 : index
    %c0_4 = arith.constant 0 : index
    %9 = vector.load %arg3[%c0_3, %c0_4] : memref<8x256xf32, #tpu.memory_space<vmem>>, vector<8x256xf32>
    tpu.vector_store %arg3[%c0_3, %c0_4], %8 {strides = array<i32>} : memref<8x256xf32, #tpu.memory_space<vmem>>, vector<8x256xf32>,
    return
  }
  func.func @transform_0(%arg0: i32) -> (i32, i32) {
    %c0_i32 = arith.constant 0 : i32
    %c0_i32_0 = arith.constant 0 : i32
    return %arg0, %c0_i32 : i32, i32
  }
  func.func @transform_1(%arg0: i32) -> (i32, i32) {
    %c0_i32 = arith.constant 0 : i32
    %c0_i32_0 = arith.constant 0 : i32
    return %arg0, %c0_i32 : i32, i32
  }
  func.func @transform_2(%arg0: i32) -> (i32, i32) {
    %c0_i32 = arith.constant 0 : i32
    %c0_i32_0 = arith.constant 0 : i32
    return %arg0, %c0_i32 : i32, i32
  }
}

</mosaic_0001>

<llo_original>
// kernel: tpu_custom_call.1
$region0: #{tpu_custom_call.1}
  #allocation0 [shape = 'u32[]', space=smem, size = 0x4, offset = 0x4, fixed_abs, tag = 'smem constant byte address 0x4 - core index']
  #allocation1 [shape = 'u32[144,128]{1,0:T(1,128)}', space=vmem, size = 0x12000, scoped, tag = 'internal scratch']
  %s0 = inlined_call_operand.vmem [shape: f32[8,1], index: 0, kind: input, shape index: {}]
  %s1 = inlined_call_operand.hbm [shape: f32[8,256], index: 1, kind: input, shape index: {}, may-alias: {1,2}]
  %s2 = inlined_call_operand.hbm [shape: f32[8,256], index: 2, kind: output, shape index: {}, may-alias: {1,2}]
  %s3 = sld [smem:[#allocation0]]
  $region22: #{tpu_custom_call.1} parent=0
    _
  %s5 = ssub.s32 1, %s3
  %s6 = scalar_select 0, %s5, %s3
  $region1: #{tpu_custom_call.1} parent=0
    #allocation2 [shape = 'u8[8192]{0}', space=vmem, size = 0x2000, scoped, tag = 'input window, operand 1, single buffered']
    #allocation3 [shape = 's32[1]{0}', space=sflag, size = 0x4, scoped, tag = 'scoped memory for tpu_custom_call.1']
    #allocation4 [shape = 's32[1]{0}', space=sflag, size = 0x4, scoped, tag = 'scoped memory for tpu_custom_call.1']
    #allocation5 [shape = 'u8[8192]{0}', space=vmem, size = 0x2000, scoped, tag = 'output window, operand 0, single buffered']
    %7 = vsyncpa [#allocation3], 0
    %8 = vsyncpa [#allocation4], 0
    // Predicated region
    $region2: #{tpu_custom_call.1} parent=1 // pred_check
      _
    $region3: #{tpu_custom_call.1} parent=1 // pred_check_branch
      %10 = sbr.rel (0) target = $region5
    $region4: #{tpu_custom_call.1} parent=1 // pred_region
      _
    $region5: #{tpu_custom_call.1} parent=1 // pred_fallthru
      _
    // Predicated region
    $region6: #{tpu_custom_call.1} parent=1 // pred_check
      _
    $region7: #{tpu_custom_call.1} parent=1 // pred_check_branch
      %12 = sbr.rel (0) target = $region9
    $region8: #{tpu_custom_call.1} parent=1 // pred_region
      %s14 = ssub.s32 256, 256
      %15 = vsyncadd [#allocation3], %s14
      %s17 = sshll.u32 [#allocation2], 4
      %s18 = int_to_ptr.vmem [resolvable:$true] %s17
      %20 = dma.hbm_to_vmem [thread:$0]  %s1, 256, %s18, [#allocation3]
    $region9: #{tpu_custom_call.1} parent=1 // pred_fallthru
      _
    // Predicated region
    $region10: #{tpu_custom_call.1} parent=1 // pred_check
      _
    $region11: #{tpu_custom_call.1} parent=1 // pred_check_branch
      %22 = sbr.rel (0) target = $region13
    $region12: #{tpu_custom_call.1} parent=1 // pred_region
      %23 = dma.done [#allocation3], 256
    $region13: #{tpu_custom_call.1} parent=1 // pred_fallthru
      _
    %v24 = vld [vmem:[%s0] sm:$0xff]
    %vm25 = vcmp.ne.f32.partialorder %v24, 0.0
    %v26 = vld [vmem:[#allocation2] sm:$0xff]
    %v27 = vld [vmem:[#allocation2 + $0x8] sm:$0xff]
    %v28 = vsel %vm25, 1, 0
    %29 = vset.pattern.permute.xlu0 0
    %30 = vperm.xlu0 %29, %v28
    %v31 = vpop.permute.xlu0 %30
    %vm32 = vcmp.eq.s32.totalorder %v31, 1
    %v33 = vsel %vm32, %v26, 0.0
    %v34 = vsel %vm32, %v27, 0.0
    %35 = vst [vmem:[#allocation5] sm:$0xff] %v33
    %36 = vst [vmem:[#allocation5 + $0x8] sm:$0xff] %v34
    // Predicated region
    $region14: #{tpu_custom_call.1} parent=1 // pred_check
      _
    $region15: #{tpu_custom_call.1} parent=1 // pred_check_branch
      %38 = sbr.rel (0) target = $region17
    $region16: #{tpu_custom_call.1} parent=1 // pred_region
      %s40 = ssub.s32 256, 256
      %41 = vsyncadd [#allocation4], %s40
      %s43 = sshll.u32 [#allocation5], 4
      %s44 = int_to_ptr.vmem [resolvable:$true] %s43
      %46 = dma.vmem_to_hbm [thread:$0]  %s44, 256, %s2, [#allocation4]
    $region17: #{tpu_custom_call.1} parent=1 // pred_fallthru
      _
    // Predicated region
    $region18: #{tpu_custom_call.1} parent=1 // pred_check
      _
    $region19: #{tpu_custom_call.1} parent=1 // pred_check_branch
      %48 = sbr.rel (0) target = $region21
    $region20: #{tpu_custom_call.1} parent=1 // pred_region
      %49 = dma.done [#allocation4], 256
    $region21: #{tpu_custom_call.1} parent=1 // pred_fallthru
      _
    %50 = vsyncpa [#allocation3], 1
    %51 = vsyncpa [#allocation4], 1

</llo_original>
